<compile_context>
chip_gen: v7x
topology: tpu7x:2x2x1
jax: 0.10.0
libtpu: 0.0.40
codegen_flags: <defaults>
</compile_context>

<pallas_src>
import functools

import jax
import jax.numpy as jnp
from jax import lax
from jax.experimental import pallas as pl
from jax.experimental.pallas import tpu as pltpu


def _critic_kernel(n_hidden_layers,
                   x_ref, w_in_ref, b_in_ref,
                   w_h_ref, b_h_ref,
                   w_out_ref, b_out_ref,
                   o_ref):
    """One batch tile of the critic forward pass (batch-on-lanes layout).

    Shapes:
      x_ref     : (tm, S)    VMEM   -- tm rows of the batch
      w_in_ref  : (H, S)     VMEM   b_in_ref : (H, 1)
      w_h_ref   : (L, H, H)  VMEM   b_h_ref  : (L, H, 1)
      w_out_ref : (1, H)     VMEM   b_out_ref: (1,) SMEM scalar
      o_ref     : (1, tm)    VMEM   -- lane-dense output row
    """
    x = x_ref[...]                                        # (tm, S)

    # Input layer: contract the feature axis of x against the input axis of
    # W_in (PyTorch (out, in) layout), producing batch-on-lanes h: (H, tm).
    h = jnp.tanh(
        lax.dot_general(
            w_in_ref[...], x,
            dimension_numbers=(((1,), (1,)), ((), ())),
            preferred_element_type=jnp.float32,
        )
        + b_in_ref[...]
    )                                                     # (H, tm)

    # Hidden layers: h <- tanh(W_h[i] @ h + b_h[i]).
    def layer(i, h):
        return jnp.tanh(
            jnp.dot(w_h_ref[i], h, preferred_element_type=jnp.float32)
            + b_h_ref[i]
        )

    if n_hidden_layers <= 16:
        # Shallow critic: static unroll -> full LLO scheduler visibility.
        for i in range(n_hidden_layers):
            h = layer(i, h)
    else:
        # Genuinely deep critic: rolled loop with dynamic first-axis Ref
        # indexing keeps the instruction stream compact.
        h = lax.fori_loop(0, n_hidden_layers, layer, h)

    # Output layer: (1, H) @ (H, tm) -> (1, tm), landing directly in the
    # lane-dense output row.  b_out is a scalar broadcast from SMEM.
    o_ref[...] = (
        jnp.dot(w_out_ref[...], h, preferred_element_type=jnp.float32)
        + b_out_ref[0]
    ).astype(o_ref.dtype)


def prepare_params(params):
    """Reshape PyTorch nn.Linear params for the kernel (NO transposes needed).

    Call ONCE outside the hot loop.  With the batch-on-lanes layout the
    PyTorch (out, in) weight layout is already the correct left operand of
    W @ h, so this is pure (free) reshaping of the bias vectors.
    """
    H = params['w_in'].shape[0]
    L = params['w_h'].shape[0]
    return {
        'w_in': params['w_in'],                     # (H, S)
        'b_in': params['b_in'].reshape(H, 1),       # (H, 1)
        'w_h': params['w_h'],                       # (L, H, H)
        'b_h': params['b_h'].reshape(L, H, 1),      # (L, H, 1)
        'w_out': params['w_out'].reshape(1, H),     # (1, H)
        'b_out': params['b_out'].reshape(1),        # (1,)  -> SMEM scalar
    }


def _cdiv(a, b):
    return -(-a // b)


def _round_up(a, m):
    return ((a + m - 1) // m) * m


def _select_batch_tile(B, max_batch_tile):
    """Pick (tm, n_tiles): lane-granular (x128) tiles, even count when free."""
    tm = min(max(max_batch_tile, 128), _round_up(B, 128))
    tm = _round_up(tm, 128)
    n_tiles = _cdiv(B, tm)
    # v7x megacore: with more than one tile, prefer an even tile count so the
    # "parallel" batch axis splits evenly across the two TensorCores -- but
    # only when it does not increase total padding (keeps v5e/v6e optimal).
    if n_tiles > 1 and n_tiles % 2 == 1:
        tm_even = _round_up(_cdiv(B, n_tiles + 1), 128)
        if (n_tiles + 1) * tm_even <= n_tiles * tm:
            tm, n_tiles = tm_even, n_tiles + 1
    return tm, n_tiles


def critic_forward(state, prepared, *, max_batch_tile=2048):
    """Critic forward pass.

    state    : (B, state_space) float32
    prepared : output of `prepare_params` (kernel-layout weights)
    Returns (B, 1) float32, matching Critic.forward.
    """
    B, S = state.shape
    H = prepared['w_in'].shape[0]
    L = prepared['w_h'].shape[0]

    tm, n_tiles = _select_batch_tile(B, max_batch_tile)
    B_pad = tm * n_tiles
    if B_pad != B:
        state = jnp.pad(state, ((0, B_pad - B), (0, 0)))

    kernel = functools.partial(_critic_kernel, L)

    out = pl.pallas_call(
        kernel,
        out_shape=jax.ShapeDtypeStruct((1, B_pad), jnp.float32),
        grid_spec=pltpu.PrefetchScalarGridSpec(
            num_scalar_prefetch=0,
            grid=(n_tiles,),
            in_specs=[
                # Activations: tiled over the batch grid axis.
                pl.BlockSpec((tm, S), lambda i: (i, 0)),
                # Weights/biases: constant index_map -> DMA'd once, VMEM-resident.
                pl.BlockSpec((H, S), lambda i: (0, 0)),
                pl.BlockSpec((H, 1), lambda i: (0, 0)),
                pl.BlockSpec((L, H, H), lambda i: (0, 0, 0)),
                pl.BlockSpec((L, H, 1), lambda i: (0, 0, 0)),
                pl.BlockSpec((1, H), lambda i: (0, 0)),
                # Scalar output bias lives in SMEM (no padded VMEM tile/DMA).
                pl.BlockSpec(memory_space=pltpu.MemorySpace.SMEM),
            ],
            # Lane-dense output: one (1, tm) row per batch tile.
            out_specs=pl.BlockSpec((1, tm), lambda i: (0, i)),
        ),
        compiler_params=pltpu.CompilerParams(
            # Batch tiles are independent -> megacore-shardable on v7x.
            dimension_semantics=("parallel",)),
    )(state, prepared['w_in'], prepared['b_in'],
      prepared['w_h'], prepared['b_h'],
      prepared['w_out'], prepared['b_out'])

    return out.reshape(B_pad)[:B].reshape(B, 1)


def init_params(key, state_space, hidden_size, n_hidden_layers):
    """Deterministic synthetic parameters, PyTorch nn.Linear shape convention."""
    keys = jax.random.split(key, 6)
    scale = 0.1
    return {
        'w_in': scale * jax.random.normal(keys[0], (hidden_size, state_space), jnp.float32),
        'b_in': scale * jax.random.normal(keys[1], (hidden_size,), jnp.float32),
        'w_h': scale * jax.random.normal(keys[2], (n_hidden_layers, hidden_size, hidden_size), jnp.float32),
        'b_h': scale * jax.random.normal(keys[3], (n_hidden_layers, hidden_size), jnp.float32),
        'w_out': scale * jax.random.normal(keys[4], (1, hidden_size), jnp.float32),
        'b_out': scale * jax.random.normal(keys[5], (1,), jnp.float32),
    }


def critic_reference(state, params):
    """Pure-JAX reference mirroring the PyTorch forward exactly."""
    x = jnp.tanh(state @ params['w_in'].T + params['b_in'])
    for i in range(params['w_h'].shape[0]):
        x = jnp.tanh(x @ params['w_h'][i].T + params['b_h'][i])
    return x @ params['w_out'].T + params['b_out']


if __name__ == "__main__":
    # Shapes consistent with the module: batch=8, state_space=16,
    # hidden_size_critic=32, n_hidden_layers_critic=2.
    B, STATE_SPACE, HIDDEN, N_HIDDEN = 8, 16, 32, 2

    key = jax.random.PRNGKey(0)
    k_state, k_params = jax.random.split(key)

    state = jax.random.normal(k_state, (B, STATE_SPACE), jnp.float32)
    params = init_params(k_params, STATE_SPACE, HIDDEN, N_HIDDEN)

    # Layout prep (pure reshapes, no transposes) happens ONCE, outside the
    # per-call hot path.
    prepared = jax.tree_util.tree_map(jax.block_until_ready, prepare_params(params))

    out = jax.block_until_ready(critic_forward(state, prepared))
    ref = critic_reference(state, params)
    assert out.shape == (B, 1), out.shape
    assert jnp.allclose(out, ref, atol=1e-5, rtol=1e-5), (out, ref)

    # Exercise the multi-tile path (ragged batch, even tile count, padding).
    B2 = 300
    state2 = jax.random.normal(jax.random.PRNGKey(1), (B2, STATE_SPACE), jnp.float32)
    out2 = jax.block_until_ready(critic_forward(state2, prepared, max_batch_tile=256))
    ref2 = critic_reference(state2, params)
    assert out2.shape == (B2, 1), out2.shape
    assert jnp.allclose(out2, ref2, atol=1e-5, rtol=1e-5)

    print("KERNEL_OK")
</pallas_src>

<mosaic_0001>
module attributes {stable_mosaic.version = 11 : i64} {
  func.func @_critic_kernel(%arg0: i32, %arg1: memref<128x16xf32, #tpu.memory_space<vmem>>, %arg2: memref<32x16xf32, #tpu.memory_space<vmem>>, %arg3: memref<32x1xf32, #tpu.memory_space<vmem>>, %arg4: memref<2x32x32xf32, #tpu.memory_space<vmem>>, %arg5: memref<2x32x1xf32, #tpu.memory_space<vmem>>, %arg6: memref<1x32xf32, #tpu.memory_space<vmem>>, %arg7: memref<1xf32, #tpu.memory_space<smem>>, %arg8: memref<1x128xf32, #tpu.memory_space<vmem>>) attributes {dimension_semantics = [#tpu.dimension_semantics<parallel>], iteration_bounds = array<i64: 1>, scalar_prefetch = 0 : i64, scratch_operands = 0 : i64, tpu.core_type = #tpu.core_type<tc>, window_params = [{transform_indices = @transform_0, window_bounds = array<i64: 128, 16>}, {pipeline_mode = #tpu.pipeline_mode<synchronous>, transform_indices = @transform_1, window_bounds = array<i64: 32, 16>}, {pipeline_mode = #tpu.pipeline_mode<synchronous>, transform_indices = @transform_2, window_bounds = array<i64: 32, 1>}, {pipeline_mode = #tpu.pipeline_mode<synchronous>, transform_indices = @transform_3, window_bounds = array<i64: 2, 32, 32>}, {pipeline_mode = #tpu.pipeline_mode<synchronous>, transform_indices = @transform_4, window_bounds = array<i64: 2, 32, 1>}, {pipeline_mode = #tpu.pipeline_mode<synchronous>, transform_indices = @transform_5, window_bounds = array<i64: 1, 32>}, {transform_indices = @transform_6, window_bounds = array<i64: 1>}, {transform_indices = @transform_7, window_bounds = array<i64: 1, 128>}]} {
    %c0 = arith.constant 0 : index
    %c0_0 = arith.constant 0 : index
    %0 = vector.load %arg1[%c0, %c0_0] : memref<128x16xf32, #tpu.memory_space<vmem>>, vector<128x16xf32>
    %c0_1 = arith.constant 0 : index
    %c0_2 = arith.constant 0 : index
    %1 = vector.load %arg2[%c0_1, %c0_2] : memref<32x16xf32, #tpu.memory_space<vmem>>, vector<32x16xf32>
    %cst = arith.constant dense<0.000000e+00> : vector<32x128xf32>
    %2 = tpu.matmul %1, %0, %cst {dimension_numbers = #tpu.dot_dimension_numbers<[1], [1], [0], [0], [0, 0, 1, 0], [], []>} : vector<32x16xf32>, vector<128x16xf32>, vector<32x128xf32> -> vector<32x128xf32>
    %c0_3 = arith.constant 0 : index
    %c0_4 = arith.constant 0 : index
    %3 = vector.load %arg3[%c0_3, %c0_4] : memref<32x1xf32, #tpu.memory_space<vmem>>, vector<32x1xf32>
    %4 = vector.broadcast %3 : vector<32x1xf32> to vector<32x128xf32>
    %5 = arith.addf %2, %4 : vector<32x128xf32>
    %6 = math.tanh %5 : vector<32x128xf32>
    %c0_5 = arith.constant 0 : index
    %c0_6 = arith.constant 0 : index
    %c0_7 = arith.constant 0 : index
    %7 = vector.load %arg4[%c0_5, %c0_6, %c0_7] : memref<2x32x32xf32, #tpu.memory_space<vmem>>, vector<1x32x32xf32>
    %8 = vector.shape_cast %7 : vector<1x32x32xf32> to vector<32x32xf32>
    %cst_8 = arith.constant dense<0.000000e+00> : vector<32x128xf32>
    %9 = tpu.matmul %8, %6, %cst_8 {dimension_numbers = #tpu.dot_dimension_numbers<[1], [0], [0], [1], [0, 0, 1, 1], [], []>} : vector<32x32xf32>, vector<32x128xf32>, vector<32x128xf32> -> vector<32x128xf32>
    %c0_9 = arith.constant 0 : index
    %c0_10 = arith.constant 0 : index
    %c0_11 = arith.constant 0 : index
    %10 = vector.load %arg5[%c0_9, %c0_10, %c0_11] : memref<2x32x1xf32, #tpu.memory_space<vmem>>, vector<1x32x1xf32>
    %11 = vector.shape_cast %10 : vector<1x32x1xf32> to vector<32x1xf32>
    %12 = vector.broadcast %11 : vector<32x1xf32> to vector<32x128xf32>
    %13 = arith.addf %9, %12 : vector<32x128xf32>
    %14 = math.tanh %13 : vector<32x128xf32>
    %c1 = arith.constant 1 : index
    %c0_12 = arith.constant 0 : index
    %c0_13 = arith.constant 0 : index
    %15 = vector.load %arg4[%c1, %c0_12, %c0_13] : memref<2x32x32xf32, #tpu.memory_space<vmem>>, vector<1x32x32xf32>
    %16 = vector.shape_cast %15 : vector<1x32x32xf32> to vector<32x32xf32>
    %cst_14 = arith.constant dense<0.000000e+00> : vector<32x128xf32>
    %17 = tpu.matmul %16, %14, %cst_14 {dimension_numbers = #tpu.dot_dimension_numbers<[1], [0], [0], [1], [0, 0, 1, 1], [], []>} : vector<32x32xf32>, vector<32x128xf32>, vector<32x128xf32> -> vector<32x128xf32>
    %c1_15 = arith.constant 1 : index
    %c0_16 = arith.constant 0 : index
    %c0_17 = arith.constant 0 : index
    %18 = vector.load %arg5[%c1_15, %c0_16, %c0_17] : memref<2x32x1xf32, #tpu.memory_space<vmem>>, vector<1x32x1xf32>
    %19 = vector.shape_cast %18 : vector<1x32x1xf32> to vector<32x1xf32>
    %20 = vector.broadcast %19 : vector<32x1xf32> to vector<32x128xf32>
    %21 = arith.addf %17, %20 : vector<32x128xf32>
    %22 = math.tanh %21 : vector<32x128xf32>
    %c0_18 = arith.constant 0 : index
    %c0_19 = arith.constant 0 : index
    %23 = vector.load %arg6[%c0_18, %c0_19] : memref<1x32xf32, #tpu.memory_space<vmem>>, vector<1x32xf32>
    %cst_20 = arith.constant dense<0.000000e+00> : vector<1x128xf32>
    %24 = tpu.matmul %23, %22, %cst_20 {dimension_numbers = #tpu.dot_dimension_numbers<[1], [0], [0], [1], [0, 0, 1, 1], [], []>} : vector<1x32xf32>, vector<32x128xf32>, vector<1x128xf32> -> vector<1x128xf32>
    %c0_21 = arith.constant 0 : index
    %25 = memref.load %arg7[%c0_21] : memref<1xf32, #tpu.memory_space<smem>>
    %26 = vector.broadcast %25 : f32 to vector<1x128xf32>
    %27 = arith.addf %24, %26 : vector<1x128xf32>
    %c0_22 = arith.constant 0 : index
    %c0_23 = arith.constant 0 : index
    %28 = vector.load %arg8[%c0_22, %c0_23] : memref<1x128xf32, #tpu.memory_space<vmem>>, vector<1x128xf32>
    tpu.vector_store %arg8[%c0_22, %c0_23], %27 {strides = array<i32>} : memref<1x128xf32, #tpu.memory_space<vmem>>, vector<1x128xf32>,
    return
  }
  func.func @transform_0(%arg0: i32) -> (i32, i32) {
    %c0_i32 = arith.constant 0 : i32
    %c0_i32_0 = arith.constant 0 : i32
    return %arg0, %c0_i32 : i32, i32
  }
  func.func @transform_1(%arg0: i32) -> (i32, i32) {
    %c0_i32 = arith.constant 0 : i32
    %c0_i32_0 = arith.constant 0 : i32
    %c0_i32_1 = arith.constant 0 : i32
    return %c0_i32, %c0_i32_0 : i32, i32
  }
  func.func @transform_2(%arg0: i32) -> (i32, i32) {
    %c0_i32 = arith.constant 0 : i32
    %c0_i32_0 = arith.constant 0 : i32
    %c0_i32_1 = arith.constant 0 : i32
    return %c0_i32, %c0_i32_0 : i32, i32
  }
  func.func @transform_3(%arg0: i32) -> (i32, i32, i32) {
    %c0_i32 = arith.constant 0 : i32
    %c0_i32_0 = arith.constant 0 : i32
    %c0_i32_1 = arith.constant 0 : i32
    %c0_i32_2 = arith.constant 0 : i32
    return %c0_i32, %c0_i32_0, %c0_i32_1 : i32, i32, i32
  }
  func.func @transform_4(%arg0: i32) -> (i32, i32, i32) {
    %c0_i32 = arith.constant 0 : i32
    %c0_i32_0 = arith.constant 0 : i32
    %c0_i32_1 = arith.constant 0 : i32
    %c0_i32_2 = arith.constant 0 : i32
    return %c0_i32, %c0_i32_0, %c0_i32_1 : i32, i32, i32
  }
  func.func @transform_5(%arg0: i32) -> (i32, i32) {
    %c0_i32 = arith.constant 0 : i32
    %c0_i32_0 = arith.constant 0 : i32
    %c0_i32_1 = arith.constant 0 : i32
    return %c0_i32, %c0_i32_0 : i32, i32
  }
  func.func @transform_6(%arg0: i32) -> i32 {
    %c0_i32 = arith.constant 0 : i32
    %c0_i32_0 = arith.constant 0 : i32
    return %c0_i32 : i32
  }
  func.func @transform_7(%arg0: i32) -> (i32, i32) {
    %c0_i32 = arith.constant 0 : i32
    %c0_i32_0 = arith.constant 0 : i32
    return %c0_i32, %arg0 : i32, i32
  }
}

</mosaic_0001>

<llo_original>
// kernel: tpu_custom_call.1
$region0: #{tpu_custom_call.1}
  #allocation0 [shape = 'u32[]', space=smem, size = 0x4, offset = 0x4, fixed_abs, tag = 'smem constant byte address 0x4 - core index']
  #allocation1 [shape = 'u32[144,128]{1,0:T(1,128)}', space=vmem, size = 0x12000, scoped, tag = 'internal scratch']
  #allocation2 [shape = 'f32[1]{0:T(128)S(6)}', space=smem, size = 0x200, scoped, tag = 'scoped memory for tpu_custom_call.1']
  %s0 = inlined_call_operand.vmem [shape: f32[128,16], index: 0, kind: input, shape index: {}]
  %s1 = inlined_call_operand.vmem [shape: f32[32,16], index: 1, kind: input, shape index: {}]
  %s2 = inlined_call_operand.vmem [shape: f32[32,1], index: 2, kind: input, shape index: {}]
  %s3 = inlined_call_operand.vmem [shape: f32[2,32,32], index: 3, kind: input, shape index: {}]
  %s4 = inlined_call_operand.vmem [shape: f32[2,32,1], index: 4, kind: input, shape index: {}]
  %s5 = inlined_call_operand.vmem [shape: f32[1,32], index: 5, kind: input, shape index: {}]
  %s6 = inlined_call_operand.<no memory space> [shape: f32[1], index: 6, kind: input, shape index: {}]
  %s7 = inlined_call_operand.hbm [shape: f32[1,128], index: 7, kind: output, shape index: {}]
  %s8 = sld [smem:[#allocation0]]
  $region38: #{tpu_custom_call.1} parent=0
    _
  %s10 = ssub.s32 1, %s8
  %s11 = scalar_select 0, %s10, %s8
  %12 = sst [smem:[#allocation2]] %s6
  $region1: #{tpu_custom_call.1} parent=0
    #allocation3 [shape = 'u8[512]{0}', space=vmem, size = 0x400, scoped, tag = 'output window, operand 0, single buffered']
    #allocation4 [shape = 's32[1]{0}', space=sflag, size = 0x4, scoped, tag = 'scoped memory for tpu_custom_call.1']
    %13 = vsyncpa [#allocation4], 0
    // Predicated region
    $region2: #{tpu_custom_call.1} parent=1 // pred_check
      _
    $region3: #{tpu_custom_call.1} parent=1 // pred_check_branch
      %15 = sbr.rel (0) target = $region5
    $region4: #{tpu_custom_call.1} parent=1 // pred_region
      _
    $region5: #{tpu_custom_call.1} parent=1 // pred_fallthru
      _
    // Predicated region
    $region6: #{tpu_custom_call.1} parent=1 // pred_check
      _
    $region7: #{tpu_custom_call.1} parent=1 // pred_check_branch
      %17 = sbr.rel (0) target = $region9
    $region8: #{tpu_custom_call.1} parent=1 // pred_region
      _
    $region9: #{tpu_custom_call.1} parent=1 // pred_fallthru
      _
    // Predicated region
    $region10: #{tpu_custom_call.1} parent=1 // pred_check
      _
    $region11: #{tpu_custom_call.1} parent=1 // pred_check_branch
      %19 = sbr.rel (0) target = $region13
    $region12: #{tpu_custom_call.1} parent=1 // pred_region
      _
    $region13: #{tpu_custom_call.1} parent=1 // pred_fallthru
      _
    // Predicated region
    $region14: #{tpu_custom_call.1} parent=1 // pred_check
      _
    $region15: #{tpu_custom_call.1} parent=1 // pred_check_branch
      %21 = sbr.rel (0) target = $region17
    $region16: #{tpu_custom_call.1} parent=1 // pred_region
      _
    $region17: #{tpu_custom_call.1} parent=1 // pred_fallthru
      _
    // Predicated region
    $region18: #{tpu_custom_call.1} parent=1 // pred_check
      _
    $region19: #{tpu_custom_call.1} parent=1 // pred_check_branch
      %23 = sbr.rel (0) target = $region21
    $region20: #{tpu_custom_call.1} parent=1 // pred_region
      _
    $region21: #{tpu_custom_call.1} parent=1 // pred_fallthru
      _
    // Predicated region
    $region22: #{tpu_custom_call.1} parent=1 // pred_check
      _
    $region23: #{tpu_custom_call.1} parent=1 // pred_check_branch
      %25 = sbr.rel (0) target = $region25
    $region24: #{tpu_custom_call.1} parent=1 // pred_region
      _
    $region25: #{tpu_custom_call.1} parent=1 // pred_fallthru
      _
    // Predicated region
    $region26: #{tpu_custom_call.1} parent=1 // pred_check
      _
    $region27: #{tpu_custom_call.1} parent=1 // pred_check_branch
      %27 = sbr.rel (0) target = $region29
    $region28: #{tpu_custom_call.1} parent=1 // pred_region
      _
    $region29: #{tpu_custom_call.1} parent=1 // pred_fallthru
      _
    %v28 = vld [vmem:[%s0] sm:$0xff]
    %v29 = vld [vmem:[%s0 + $0x8] sm:$0xff]
    %v30 = vld [vmem:[%s0 + $0x10] sm:$0xff]
    %v31 = vld [vmem:[%s0 + $0x18] sm:$0xff]
    %v32 = vld [vmem:[%s0 + $0x20] sm:$0xff]
    %v33 = vld [vmem:[%s0 + $0x28] sm:$0xff]
    %v34 = vld [vmem:[%s0 + $0x30] sm:$0xff]
    %v35 = vld [vmem:[%s0 + $0x38] sm:$0xff]
    %v36 = vld [vmem:[%s0 + $0x40] sm:$0xff]
    %v37 = vld [vmem:[%s0 + $0x48] sm:$0xff]
    %v38 = vld [vmem:[%s0 + $0x50] sm:$0xff]
    %v39 = vld [vmem:[%s0 + $0x58] sm:$0xff]
    %v40 = vld [vmem:[%s0 + $0x60] sm:$0xff]
    %v41 = vld [vmem:[%s0 + $0x68] sm:$0xff]
    %v42 = vld [vmem:[%s0 + $0x70] sm:$0xff]
    %v43 = vld [vmem:[%s0 + $0x78] sm:$0xff]
    %v44 = vld [vmem:[%s1] sm:$0xff]
    %v45 = vld [vmem:[%s1 + $0x8] sm:$0xff]
    %v46 = vld [vmem:[%s1 + $0x10] sm:$0xff]
    %v47 = vld [vmem:[%s1 + $0x18] sm:$0xff]
    %v48 = vld [vmem:[%s2] sm:$0xff]
    %v49 = vld [vmem:[%s2 + $0x8] sm:$0xff]
    %v50 = vld [vmem:[%s2 + $0x10] sm:$0xff]
    %v51 = vld [vmem:[%s2 + $0x18] sm:$0xff]
    %53 = vset.pattern.permute.xlu0 0
    %54 = vperm.xlu0 %53, %v48
    %v55 = vpop.permute.xlu0 %54
    %58 = vset.pattern.permute.xlu0 0
    %59 = vperm.xlu0 %58, %v49
    %v60 = vpop.permute.xlu0 %59
    %63 = vset.pattern.permute.xlu0 0
    %64 = vperm.xlu0 %63, %v50
    %v65 = vpop.permute.xlu0 %64
    %68 = vset.pattern.permute.xlu0 0
    %69 = vperm.xlu0 %68, %v51
    %v70 = vpop.permute.xlu0 %69
    %vm72 = vcmask 130048
    %v74 = vsel %vm72, %v44, 0
    %v77 = vsel %vm72, %v45, 0
    %v80 = vsel %vm72, %v46, 0
    %v83 = vsel %vm72, %v47, 0
    %v86 = vsel %vm72, %v28, 0
    %v89 = vsel %vm72, %v29, 0
    %v92 = vsel %vm72, %v30, 0
    %v95 = vsel %vm72, %v31, 0
    %v98 = vsel %vm72, %v32, 0
    %v101 = vsel %vm72, %v33, 0
    %v104 = vsel %vm72, %v34, 0
    %v107 = vsel %vm72, %v35, 0
    %v110 = vsel %vm72, %v36, 0
    %v113 = vsel %vm72, %v37, 0
    %v116 = vsel %vm72, %v38, 0
    %v119 = vsel %vm72, %v39, 0
    %v122 = vsel %vm72, %v40, 0
    %v125 = vsel %vm72, %v41, 0
    %v128 = vsel %vm72, %v42, 0
    %v131 = vsel %vm72, %v43, 0
    %133 = vmatprep.subr.mxu0 0.0
    %134 = vmatpush1.xpose.msra.mxu0 %v86
    %135 = vmatprep.subr.mxu0 0.0
    %136 = vmatpush1.xpose.msra.mxu0 %v89
    %137 = vmatprep.subr.mxu0 0.0
    %138 = vmatpush1.xpose.msra.mxu0 %v92
    %139 = vmatprep.subr.mxu0 0.0
    %140 = vmatpush1.xpose.msra.mxu0 %v95
    %141 = vmatprep.subr.mxu0 0.0
    %142 = vmatpush1.xpose.msra.mxu0 %v98
    %143 = vmatprep.subr.mxu0 0.0
    %144 = vmatpush1.xpose.msra.mxu0 %v101
    %145 = vmatprep.subr.mxu0 0.0
    %146 = vmatpush1.xpose.msra.mxu0 %v104
    %147 = vmatprep.subr.mxu0 0.0
    %148 = vmatpush1.xpose.msra.mxu0 %v107
    %149 = vmatprep.subr.mxu0 0.0
    %150 = vmatpush1.xpose.msra.mxu0 %v110
    %151 = vmatprep.subr.mxu0 0.0
    %152 = vmatpush1.xpose.msra.mxu0 %v113
    %153 = vmatprep.subr.mxu0 0.0
    %154 = vmatpush1.xpose.msra.mxu0 %v116
    %155 = vmatprep.subr.mxu0 0.0
    %156 = vmatpush1.xpose.msra.mxu0 %v119
    %157 = vmatprep.subr.mxu0 0.0
    %158 = vmatpush1.xpose.msra.mxu0 %v122
    %159 = vmatprep.subr.mxu0 0.0
    %160 = vmatpush1.xpose.msra.mxu0 %v125
    %161 = vmatprep.subr.mxu0 0.0
    %162 = vmatpush1.xpose.msra.mxu0 %v128
    %163 = vmatprep.subr.mxu0 0.0
    %164 = vmatpush1.xpose.msra.mxu0 %v131
    %165 = vmatprep.subr.mxu0 0.0
    %166 = vmatpush1.xpose.msra.mxu0 0.0
    %167 = vmatprep.subr.mxu0 0.0
    %168 = vmatpush1.xpose.msra.mxu0 0.0
    %169 = vmatprep.subr.mxu0 0.0
    %170 = vmatpush1.xpose.msra.mxu0 0.0
    %171 = vmatprep.subr.mxu0 0.0
    %172 = vmatpush1.xpose.msra.mxu0 0.0
    %173 = vmatprep.subr.mxu0 0.0
    %174 = vmatpush1.xpose.msra.mxu0 0.0
    %175 = vmatprep.subr.mxu0 0.0
    %176 = vmatpush1.xpose.msra.mxu0 0.0
    %177 = vmatprep.subr.mxu0 0.0
    %178 = vmatpush1.xpose.msra.mxu0 0.0
    %179 = vmatprep.subr.mxu0 0.0
    %180 = vmatpush1.xpose.msra.mxu0 0.0
    %181 = vmatprep.subr.mxu0 0.0
    %182 = vmatpush1.xpose.msra.mxu0 0.0
    %183 = vmatprep.subr.mxu0 0.0
    %184 = vmatpush1.xpose.msra.mxu0 0.0
    %185 = vmatprep.subr.mxu0 0.0
    %186 = vmatpush1.xpose.msra.mxu0 0.0
    %187 = vmatprep.subr.mxu0 0.0
    %188 = vmatpush1.xpose.msra.mxu0 0.0
    %189 = vmatprep.subr.mxu0 0.0
    %190 = vmatpush1.xpose.msra.mxu0 0.0
    %191 = vmatprep.subr.mxu0 0.0
    %192 = vmatpush1.xpose.msra.mxu0 0.0
    %193 = vmatprep.subr.mxu0 0.0
    %194 = vmatpush1.xpose.msra.mxu0 0.0
    %195 = vmatprep.subr.mxu0 0.0
    %196 = vmatpush1.xpose.msra.mxu0 0.0
    %197 = vmatprep.mubr.f32.mxu0 0.0
    %198 = vmatmul.mubr.f32.gmra.mrb[0].mxu0 %v74
    %v199 = vpop.f32.mrb[0].mxu0
    %v200 = vadd.f32 %v55, %v199
    %v201 = vpop.f32.mrb[0].mxu0
    %202 = vmatprep.mubr.f32.mxu0 0.0
    %203 = vmatmul.mubr.f32.gmra.mrb[0].mxu0 %v77
    %v204 = vpop.f32.mrb[0].mxu0
    %v205 = vadd.f32 %v60, %v204
    %v206 = vpop.f32.mrb[0].mxu0
    %207 = vmatprep.mubr.f32.mxu0 0.0
    %208 = vmatmul.mubr.f32.gmra.mrb[0].mxu0 %v80
    %v209 = vpop.f32.mrb[0].mxu0
    %v210 = vadd.f32 %v65, %v209
    %v211 = vpop.f32.mrb[0].mxu0
    %212 = vmatprep.mubr.f32.mxu0 0.0
    %213 = vmatmul.mubr.f32.gmra.mrb[0].mxu0 %v83
    %v214 = vpop.f32.mrb[0].mxu0
    %v215 = vadd.f32 %v70, %v214
    %v216 = vpop.f32.mrb[0].mxu0
    %217 = vdwg.mxu0
    %v218 = vtanh.pop %v200
    %v219 = vtanh.pop %v205
    %v220 = vtanh.pop %v210
    %v221 = vtanh.pop %v215
    %v222 = vld [vmem:[%s3] sm:$0xff]
    %v223 = vld [vmem:[%s3 + $0x8] sm:$0xff]
    %v224 = vld [vmem:[%s3 + $0x10] sm:$0xff]
    %v225 = vld [vmem:[%s3 + $0x18] sm:$0xff]
    %v226 = vld [vmem:[%s4] sm:$0xff]
    %v227 = vld [vmem:[%s4 + $0x8] sm:$0xff]
    %v228 = vld [vmem:[%s4 + $0x10] sm:$0xff]
    %v229 = vld [vmem:[%s4 + $0x18] sm:$0xff]
    %231 = vset.pattern.permute.xlu0 0
    %232 = vperm.xlu0 %231, %v226
    %v233 = vpop.permute.xlu0 %232
    %236 = vset.pattern.permute.xlu0 0
    %237 = vperm.xlu0 %236, %v227
    %v238 = vpop.permute.xlu0 %237
    %241 = vset.pattern.permute.xlu0 0
    %242 = vperm.xlu0 %241, %v228
    %v243 = vpop.permute.xlu0 %242
    %246 = vset.pattern.permute.xlu0 0
    %247 = vperm.xlu0 %246, %v229
    %v248 = vpop.permute.xlu0 %247
    %vm250 = vcmask 261120
    %v252 = vsel %vm250, %v222, 0
    %v255 = vsel %vm250, %v223, 0
    %v258 = vsel %vm250, %v224, 0
    %v261 = vsel %vm250, %v225, 0
    %263 = vmatprep.subr.mxu0 0.0
    %264 = vmatpush1.msra.mxu0 %v218
    %265 = vmatprep.subr.mxu0 0.0
    %266 = vmatpush1.msra.mxu0 %v219
    %267 = vmatprep.subr.mxu0 0.0
    %268 = vmatpush1.msra.mxu0 %v220
    %269 = vmatprep.subr.mxu0 0.0
    %270 = vmatpush1.msra.mxu0 %v221
    %271 = vmatprep.subr.mxu0 0.0
    %272 = vmatpush1.msra.mxu0 0.0
    %273 = vmatprep.subr.mxu0 0.0
    %274 = vmatpush1.msra.mxu0 0.0
    %275 = vmatprep.subr.mxu0 0.0
    %276 = vmatpush1.msra.mxu0 0.0
    %277 = vmatprep.subr.mxu0 0.0
    %278 = vmatpush1.msra.mxu0 0.0
    %279 = vmatprep.subr.mxu0 0.0
    %280 = vmatpush1.msra.mxu0 0.0
    %281 = vmatprep.subr.mxu0 0.0
    %282 = vmatpush1.msra.mxu0 0.0
    %283 = vmatprep.subr.mxu0 0.0
    %284 = vmatpush1.msra.mxu0 0.0
    %285 = vmatprep.subr.mxu0 0.0
    %286 = vmatpush1.msra.mxu0 0.0
    %287 = vmatprep.subr.mxu0 0.0
    %288 = vmatpush1.msra.mxu0 0.0
    %289 = vmatprep.subr.mxu0 0.0
    %290 = vmatpush1.msra.mxu0 0.0
    %291 = vmatprep.subr.mxu0 0.0
    %292 = vmatpush1.msra.mxu0 0.0
    %293 = vmatprep.subr.mxu0 0.0
    %294 = vmatpush1.msra.mxu0 0.0
    %295 = vmatprep.subr.mxu0 0.0
    %296 = vmatpush1.msra.mxu0 0.0
    %297 = vmatprep.subr.mxu0 0.0
    %298 = vmatpush1.msra.mxu0 0.0
    %299 = vmatprep.subr.mxu0 0.0
    %300 = vmatpush1.msra.mxu0 0.0
    %301 = vmatprep.subr.mxu0 0.0
    %302 = vmatpush1.msra.mxu0 0.0
    %303 = vmatprep.subr.mxu0 0.0
    %304 = vmatpush1.msra.mxu0 0.0
    %305 = vmatprep.subr.mxu0 0.0
    %306 = vmatpush1.msra.mxu0 0.0
    %307 = vmatprep.subr.mxu0 0.0
    %308 = vmatpush1.msra.mxu0 0.0
    %309 = vmatprep.subr.mxu0 0.0
    %310 = vmatpush1.msra.mxu0 0.0
    %311 = vmatprep.subr.mxu0 0.0
    %312 = vmatpush1.msra.mxu0 0.0
    %313 = vmatprep.subr.mxu0 0.0
    %314 = vmatpush1.msra.mxu0 0.0
    %315 = vmatprep.subr.mxu0 0.0
    %316 = vmatpush1.msra.mxu0 0.0
    %317 = vmatprep.subr.mxu0 0.0
    %318 = vmatpush1.msra.mxu0 0.0
    %319 = vmatprep.subr.mxu0 0.0
    %320 = vmatpush1.msra.mxu0 0.0
    %321 = vmatprep.subr.mxu0 0.0
    %322 = vmatpush1.msra.mxu0 0.0
    %323 = vmatprep.subr.mxu0 0.0
    %324 = vmatpush1.msra.mxu0 0.0
    %325 = vmatprep.subr.mxu0 0.0
    %326 = vmatpush1.msra.mxu0 0.0
    %327 = vmatprep.mubr.f32.mxu0 0.0
    %328 = vmatmul.mubr.f32.gmra.mrb[0].mxu0 %v252
    %v329 = vpop.f32.mrb[0].mxu0
    %v330 = vadd.f32 %v233, %v329
    %v331 = vpop.f32.mrb[0].mxu0
    %332 = vmatprep.mubr.f32.mxu0 0.0
    %333 = vmatmul.mubr.f32.gmra.mrb[0].mxu0 %v255
    %v334 = vpop.f32.mrb[0].mxu0
    %v335 = vadd.f32 %v238, %v334
    %v336 = vpop.f32.mrb[0].mxu0
    %337 = vmatprep.mubr.f32.mxu0 0.0
    %338 = vmatmul.mubr.f32.gmra.mrb[0].mxu0 %v258
    %v339 = vpop.f32.mrb[0].mxu0
    %v340 = vadd.f32 %v243, %v339
    %v341 = vpop.f32.mrb[0].mxu0
    %342 = vmatprep.mubr.f32.mxu0 0.0
    %343 = vmatmul.mubr.f32.gmra.mrb[0].mxu0 %v261
    %v344 = vpop.f32.mrb[0].mxu0
    %v345 = vadd.f32 %v248, %v344
    %v346 = vpop.f32.mrb[0].mxu0
    %347 = vdwg.mxu0
    %v348 = vtanh.pop %v330
    %v349 = vtanh.pop %v335
    %v350 = vtanh.pop %v340
    %v351 = vtanh.pop %v345
    %s352 = scalar_lea.vmem %s3, 32
    %v353 = vld [vmem:[%s352] sm:$0xff]
    %v354 = vld [vmem:[%s352 + $0x8] sm:$0xff]
    %v355 = vld [vmem:[%s352 + $0x10] sm:$0xff]
    %v356 = vld [vmem:[%s352 + $0x18] sm:$0xff]
    %s357 = scalar_lea.vmem %s4, 32
    %v358 = vld [vmem:[%s357] sm:$0xff]
    %v359 = vld [vmem:[%s357 + $0x8] sm:$0xff]
    %v360 = vld [vmem:[%s357 + $0x10] sm:$0xff]
    %v361 = vld [vmem:[%s357 + $0x18] sm:$0xff]
    %363 = vset.pattern.permute.xlu0 0
    %364 = vperm.xlu0 %363, %v358
    %v365 = vpop.permute.xlu0 %364
    %368 = vset.pattern.permute.xlu0 0
    %369 = vperm.xlu0 %368, %v359
    %v370 = vpop.permute.xlu0 %369
    %373 = vset.pattern.permute.xlu0 0
    %374 = vperm.xlu0 %373, %v360
    %v375 = vpop.permute.xlu0 %374
    %378 = vset.pattern.permute.xlu0 0
    %379 = vperm.xlu0 %378, %v361
    %v380 = vpop.permute.xlu0 %379
    %v383 = vsel %vm250, %v353, 0
    %v386 = vsel %vm250, %v354, 0
    %v389 = vsel %vm250, %v355, 0
    %v392 = vsel %vm250, %v356, 0
    %394 = vmatprep.subr.mxu0 0.0
    %395 = vmatpush1.msra.mxu0 %v348
    %396 = vmatprep.subr.mxu0 0.0
    %397 = vmatpush1.msra.mxu0 %v349
    %398 = vmatprep.subr.mxu0 0.0
    %399 = vmatpush1.msra.mxu0 %v350
    %400 = vmatprep.subr.mxu0 0.0
    %401 = vmatpush1.msra.mxu0 %v351
    %402 = vmatprep.subr.mxu0 0.0
    %403 = vmatpush1.msra.mxu0 0.0
    %404 = vmatprep.subr.mxu0 0.0
    %405 = vmatpush1.msra.mxu0 0.0
    %406 = vmatprep.subr.mxu0 0.0
    %407 = vmatpush1.msra.mxu0 0.0
    %408 = vmatprep.subr.mxu0 0.0
    %409 = vmatpush1.msra.mxu0 0.0
    %410 = vmatprep.subr.mxu0 0.0
    %411 = vmatpush1.msra.mxu0 0.0
    %412 = vmatprep.subr.mxu0 0.0
    %413 = vmatpush1.msra.mxu0 0.0
    %414 = vmatprep.subr.mxu0 0.0
    %415 = vmatpush1.msra.mxu0 0.0
    %416 = vmatprep.subr.mxu0 0.0
    %417 = vmatpush1.msra.mxu0 0.0
    %418 = vmatprep.subr.mxu0 0.0
    %419 = vmatpush1.msra.mxu0 0.0
    %420 = vmatprep.subr.mxu0 0.0
    %421 = vmatpush1.msra.mxu0 0.0
    %422 = vmatprep.subr.mxu0 0.0
    %423 = vmatpush1.msra.mxu0 0.0
    %424 = vmatprep.subr.mxu0 0.0
    %425 = vmatpush1.msra.mxu0 0.0
    %426 = vmatprep.subr.mxu0 0.0
    %427 = vmatpush1.msra.mxu0 0.0
    %428 = vmatprep.subr.mxu0 0.0
    %429 = vmatpush1.msra.mxu0 0.0
    %430 = vmatprep.subr.mxu0 0.0
    %431 = vmatpush1.msra.mxu0 0.0
    %432 = vmatprep.subr.mxu0 0.0
    %433 = vmatpush1.msra.mxu0 0.0
    %434 = vmatprep.subr.mxu0 0.0
    %435 = vmatpush1.msra.mxu0 0.0
    %436 = vmatprep.subr.mxu0 0.0
    %437 = vmatpush1.msra.mxu0 0.0
    %438 = vmatprep.subr.mxu0 0.0
    %439 = vmatpush1.msra.mxu0 0.0
    %440 = vmatprep.subr.mxu0 0.0
    %441 = vmatpush1.msra.mxu0 0.0
    %442 = vmatprep.subr.mxu0 0.0
    %443 = vmatpush1.msra.mxu0 0.0
    %444 = vmatprep.subr.mxu0 0.0
    %445 = vmatpush1.msra.mxu0 0.0
    %446 = vmatprep.subr.mxu0 0.0
    %447 = vmatpush1.msra.mxu0 0.0
    %448 = vmatprep.subr.mxu0 0.0
    %449 = vmatpush1.msra.mxu0 0.0
    %450 = vmatprep.subr.mxu0 0.0
    %451 = vmatpush1.msra.mxu0 0.0
    %452 = vmatprep.subr.mxu0 0.0
    %453 = vmatpush1.msra.mxu0 0.0
    %454 = vmatprep.subr.mxu0 0.0
    %455 = vmatpush1.msra.mxu0 0.0
    %456 = vmatprep.subr.mxu0 0.0
    %457 = vmatpush1.msra.mxu0 0.0
    %458 = vmatprep.mubr.f32.mxu0 0.0
    %459 = vmatmul.mubr.f32.gmra.mrb[0].mxu0 %v383
    %v460 = vpop.f32.mrb[0].mxu0
    %v461 = vadd.f32 %v365, %v460
    %v462 = vpop.f32.mrb[0].mxu0
    %463 = vmatprep.mubr.f32.mxu0 0.0
    %464 = vmatmul.mubr.f32.gmra.mrb[0].mxu0 %v386
    %v465 = vpop.f32.mrb[0].mxu0
    %v466 = vadd.f32 %v370, %v465
    %v467 = vpop.f32.mrb[0].mxu0
    %468 = vmatprep.mubr.f32.mxu0 0.0
    %469 = vmatmul.mubr.f32.gmra.mrb[0].mxu0 %v389
    %v470 = vpop.f32.mrb[0].mxu0
    %v471 = vadd.f32 %v375, %v470
    %v472 = vpop.f32.mrb[0].mxu0
    %473 = vmatprep.mubr.f32.mxu0 0.0
    %474 = vmatmul.mubr.f32.gmra.mrb[0].mxu0 %v392
    %v475 = vpop.f32.mrb[0].mxu0
    %v476 = vadd.f32 %v380, %v475
    %v477 = vpop.f32.mrb[0].mxu0
    %478 = vdwg.mxu0
    %v479 = vtanh.pop %v461
    %v480 = vtanh.pop %v466
    %v481 = vtanh.pop %v471
    %v482 = vtanh.pop %v476
    %v483 = vld [vmem:[%s5] sm:$0x1]
    %s484 = sld [smem:[#allocation2]]
    %v485 = vstv %s484
    %v487 = vsel %vm250, %v483, 0
    %489 = vmatprep.subr.mxu0 0.0
    %490 = vmatpush1.msra.mxu0 %v479
    %491 = vmatprep.subr.mxu0 0.0
    %492 = vmatpush1.msra.mxu0 %v480
    %493 = vmatprep.subr.mxu0 0.0
    %494 = vmatpush1.msra.mxu0 %v481
    %495 = vmatprep.subr.mxu0 0.0
    %496 = vmatpush1.msra.mxu0 %v482
    %497 = vmatprep.subr.mxu0 0.0
    %498 = vmatpush1.msra.mxu0 0.0
    %499 = vmatprep.subr.mxu0 0.0
    %500 = vmatpush1.msra.mxu0 0.0
    %501 = vmatprep.subr.mxu0 0.0
    %502 = vmatpush1.msra.mxu0 0.0
    %503 = vmatprep.subr.mxu0 0.0
    %504 = vmatpush1.msra.mxu0 0.0
    %505 = vmatprep.subr.mxu0 0.0
    %506 = vmatpush1.msra.mxu0 0.0
    %507 = vmatprep.subr.mxu0 0.0
    %508 = vmatpush1.msra.mxu0 0.0
    %509 = vmatprep.subr.mxu0 0.0
    %510 = vmatpush1.msra.mxu0 0.0
    %511 = vmatprep.subr.mxu0 0.0
    %512 = vmatpush1.msra.mxu0 0.0
    %513 = vmatprep.subr.mxu0 0.0
    %514 = vmatpush1.msra.mxu0 0.0
    %515 = vmatprep.subr.mxu0 0.0
    %516 = vmatpush1.msra.mxu0 0.0
    %517 = vmatprep.subr.mxu0 0.0
    %518 = vmatpush1.msra.mxu0 0.0
    %519 = vmatprep.subr.mxu0 0.0
    %520 = vmatpush1.msra.mxu0 0.0
    %521 = vmatprep.subr.mxu0 0.0
    %522 = vmatpush1.msra.mxu0 0.0
    %523 = vmatprep.subr.mxu0 0.0
    %524 = vmatpush1.msra.mxu0 0.0
    %525 = vmatprep.subr.mxu0 0.0
    %526 = vmatpush1.msra.mxu0 0.0
    %527 = vmatprep.subr.mxu0 0.0
    %528 = vmatpush1.msra.mxu0 0.0
    %529 = vmatprep.subr.mxu0 0.0
    %530 = vmatpush1.msra.mxu0 0.0
    %531 = vmatprep.subr.mxu0 0.0
    %532 = vmatpush1.msra.mxu0 0.0
    %533 = vmatprep.subr.mxu0 0.0
    %534 = vmatpush1.msra.mxu0 0.0
    %535 = vmatprep.subr.mxu0 0.0
    %536 = vmatpush1.msra.mxu0 0.0
    %537 = vmatprep.subr.mxu0 0.0
    %538 = vmatpush1.msra.mxu0 0.0
    %539 = vmatprep.subr.mxu0 0.0
    %540 = vmatpush1.msra.mxu0 0.0
    %541 = vmatprep.subr.mxu0 0.0
    %542 = vmatpush1.msra.mxu0 0.0
    %543 = vmatprep.subr.mxu0 0.0
    %544 = vmatpush1.msra.mxu0 0.0
    %545 = vmatprep.subr.mxu0 0.0
    %546 = vmatpush1.msra.mxu0 0.0
    %547 = vmatprep.subr.mxu0 0.0
    %548 = vmatpush1.msra.mxu0 0.0
    %549 = vmatprep.subr.mxu0 0.0
    %550 = vmatpush1.msra.mxu0 0.0
    %551 = vmatprep.subr.mxu0 0.0
    %552 = vmatpush1.msra.mxu0 0.0
    %553 = vmatprep.mubr.f32.mxu0 0.0
    %554 = vmatmul.mubr.f32.gmra.mrb[0].mxu0 %v487
    %v555 = vpop.f32.mrb[0].mxu0
    %v556 = vadd.f32 %v485, %v555
    %v557 = vpop.f32.mrb[0].mxu0
    %558 = vdwg.mxu0
    %559 = vst [vmem:[#allocation3] sm:$0x1] %v556
    // Predicated region
    $region30: #{tpu_custom_call.1} parent=1 // pred_check
      _
    $region31: #{tpu_custom_call.1} parent=1 // pred_check_branch
      %561 = sbr.rel (0) target = $region33
    $region32: #{tpu_custom_call.1} parent=1 // pred_region
      %s563 = ssub.s32 16, 16
      %564 = vsyncadd [#allocation4], %s563
      %s566 = sshll.u32 [#allocation3], 4
      %s567 = int_to_ptr.vmem [resolvable:$true] %s566
      %569 = dma.vmem_to_hbm [thread:$0]  %s567, 16, %s7, [#allocation4]
    $region33: #{tpu_custom_call.1} parent=1 // pred_fallthru
      _
    // Predicated region
    $region34: #{tpu_custom_call.1} parent=1 // pred_check
      _
    $region35: #{tpu_custom_call.1} parent=1 // pred_check_branch
      %571 = sbr.rel (0) target = $region37
    $region36: #{tpu_custom_call.1} parent=1 // pred_region
      %572 = dma.done [#allocation4], 16
    $region37: #{tpu_custom_call.1} parent=1 // pred_fallthru
      _
    %573 = vsyncpa [#allocation4], 1

</llo_original>
